<compile_context>
chip_gen: v7x
topology: tpu7x:2x2x1
jax: 0.10.0
libtpu: 0.0.40
codegen_flags: <defaults>
</compile_context>

<pallas_src>
import functools
import math

import jax
import jax.numpy as jnp
from jax import lax
from jax.experimental import pallas as pl
from jax.experimental.pallas import tpu as pltpu


def _round_up(v, k):
    return (v + k - 1) // k * k


def _cdiv(a, b):
    return -(-a // b)


def _vmem_capacity_bytes():
    """Physical VMEM per core; drives generation-aware tile sizes (v7x = 64 MiB)."""
    try:
        info = pltpu.get_tpu_info()
        for attr in ("vmem_capacity_bytes", "vmem_size_bytes", "vmem_bytes"):
            cap = getattr(info, attr, None)
            if cap:
                return int(cap)
    except Exception:
        pass
    try:
        kind = jax.devices()[0].device_kind.lower()
    except Exception:
        kind = ""
    if "v2" in kind or "v3" in kind:
        return 16 * 1024 * 1024
    if "v4" in kind or "v5" in kind or "v6" in kind:
        return 128 * 1024 * 1024
    return 64 * 1024 * 1024  # unknown / v7x: conservative


def _vmem_need(tm, th, dim, act_isz, out_isz):
    """Bytes for the double-buffered pipeline + resident f32 accumulator."""
    return (2 * act_isz * tm * dim        # x tile (double-buffered; resident across hidden steps)
            + 2 * act_isz * dim * th      # streamed w_in tile
            + 2 * act_isz * th * dim      # streamed w_out tile
            + 2 * out_isz * tm * dim      # output tile
            + 4 * tm * dim                # f32 accumulator scratch
            + 4 * 4 * (th + dim))         # biases (negligible)


def _select_tiles(m, dim, hidden, budget_bytes, act_isz, out_isz):
    """Pick (tm, th) fitting `budget_bytes`; maximize tm (arithmetic intensity), keep th a
    multiple of 256 and >= 512 when possible (full-width MXU feeds, few grid steps)."""
    tm_cap = max(8, min(1024, _round_up(m, 8)))
    th_cap = max(128, min(2048, _round_up(hidden, 128)))
    tm_cands = sorted({t for t in (1024, 768, 512, 384, 256, 128, 64, 32, 16, 8, tm_cap)
                       if t <= tm_cap}, reverse=True)
    th_cands = sorted({t for t in (2048, 1792, 1536, 1280, 1024, 768, 512, 256, 128, th_cap)
                       if t <= th_cap}, reverse=True)

    min_th = min(512, th_cap)
    for prefer_wide in (True, False):
        for tm_ in tm_cands:
            for th_ in th_cands:
                if prefer_wide and th_ < min_th:
                    continue
                if _vmem_need(tm_, th_, dim, act_isz, out_isz) <= budget_bytes:
                    return tm_, th_
    return tm_cands[-1], th_cands[-1]


def _ffn_kernel(x_ref, win_ref, bin_ref, wout_ref, bout_ref, o_ref, acc_ref,
                *, hidden, th, ragged):
    # x_ref:    (TM, dim)   win_ref: (dim, TH)   bin_ref: (1, TH)
    # wout_ref: (TH, dim)   bout_ref: (1, dim)
    # o_ref:    (TM, dim)   acc_ref: (TM, dim) f32 scratch, persists across hidden steps
    h_idx = pl.program_id(1)

    @pl.when(h_idx == 0)
    def _():
        acc_ref[...] = jnp.zeros_like(acc_ref)

    # First matmul (MXU) + bias, f32 accumulation.
    h = jnp.dot(x_ref[...], win_ref[...], preferred_element_type=jnp.float32)
    h = h + bin_ref[...].astype(jnp.float32)

    # Exact erf-based GELU in f32 (matches torch.nn.functional.gelu default used here).
    g = 0.5 * h * (1.0 + lax.erf(h * (1.0 / math.sqrt(2.0))))
    # dropout(p=0.0) is the identity.

    wout = wout_ref[...]
    if ragged:
        # Last hidden tile overruns `hidden`: out-of-bounds reads are undefined, so zero
        # both the tail columns of g and the tail rows of w_out before the MXU.
        valid = jnp.minimum(hidden - h_idx * th, th)
        col = lax.broadcasted_iota(jnp.int32, g.shape, 1)
        g = jnp.where(col < valid, g, 0.0)
        row = lax.broadcasted_iota(jnp.int32, wout.shape, 0)
        wout = jnp.where(row < valid, wout, jnp.zeros_like(wout))

    # Second matmul: accumulate this hidden tile's contribution.
    acc_ref[...] += jnp.dot(g.astype(wout.dtype), wout, preferred_element_type=jnp.float32)

    @pl.when(h_idx == pl.num_programs(1) - 1)
    def _():
        o_ref[...] = (acc_ref[...] + bout_ref[...].astype(jnp.float32)).astype(o_ref.dtype)


def feed_forward(x, w_in, b_in, w_out, b_out, *, compute_dtype=jnp.bfloat16, tm=None, th=None):
    """ChatGLM FeedForward forward pass.

    x: [..., dim]; w_in: [dim, hidden] (transposed vs torch Linear.weight); b_in: [hidden];
    w_out: [hidden, dim]; b_out: [dim].

    `compute_dtype` is the MXU feed dtype (bf16 default: halves HBM traffic, fast MXU path);
    accumulation is always f32 and the result is returned in x.dtype.  Pass
    compute_dtype=jnp.float32 for exact-f32 semantics.  tm/th override the auto tiling.
    """
    dim = x.shape[-1]
    hidden = w_in.shape[-1]
    assert w_in.shape == (dim, hidden) and w_out.shape == (hidden, dim)
    assert b_in.shape == (hidden,) and b_out.shape == (dim,)
    lead = x.shape[:-1]
    m = int(math.prod(lead)) if lead else 1
    out_dtype = x.dtype
    if compute_dtype is None:
        compute_dtype = x.dtype

    # MXU feeds in compute_dtype; biases keep their original dtype (added on f32 acc anyway).
    x2d = x.reshape(m, dim).astype(compute_dtype)
    w_in_c = w_in.astype(compute_dtype)
    w_out_c = w_out.astype(compute_dtype)
    b_in2d = b_in.reshape(1, hidden)
    b_out2d = b_out.reshape(1, dim)

    act_isz = jnp.dtype(compute_dtype).itemsize
    out_isz = jnp.dtype(out_dtype).itemsize

    # Generation-aware tiling from a real VMEM budget.
    vmem_cap = _vmem_capacity_bytes()
    budget = int(0.85 * vmem_cap)
    tm_sel, th_sel = _select_tiles(m, dim, hidden, budget, act_isz, out_isz)
    tm = tm_sel if tm is None else tm
    th = th_sel if th is None else th
    assert tm % 8 == 0 and th % 128 == 0, "tm must be a multiple of 8, th a multiple of 128"

    grid_m = _cdiv(m, tm)
    grid_h = _cdiv(hidden, th)
    ragged = (hidden % th) != 0

    vmem_need = _vmem_need(tm, th, dim, act_isz, out_isz)
    vmem_limit = int(min(0.9 * vmem_cap, max(1.2 * vmem_need + (4 << 20), 32 << 20)))
    vmem_limit = max(vmem_limit, vmem_need + (2 << 20))

    # Honest cost estimate: weights (and b_in) are re-streamed once per row tile.
    weight_bytes = grid_m * ((w_in_c.size + w_out_c.size) * act_isz
                             + b_in.size * jnp.dtype(b_in.dtype).itemsize) \
        + b_out.size * jnp.dtype(b_out.dtype).itemsize
    cost = pl.CostEstimate(
        flops=4 * m * dim * hidden,            # two matmuls
        transcendentals=m * hidden,            # erf
        bytes_accessed=int(m * dim * act_isz   # x read (resident across hidden steps)
                           + weight_bytes
                           + m * dim * out_isz))  # output write

    kernel = functools.partial(_ffn_kernel, hidden=hidden, th=th, ragged=ragged)

    out = pl.pallas_call(
        kernel,
        out_shape=jax.ShapeDtypeStruct((m, dim), out_dtype),
        grid=(grid_m, grid_h),
        in_specs=[
            pl.BlockSpec((tm, dim), lambda i, h: (i, 0)),   # x rows: resident across hidden steps
            pl.BlockSpec((dim, th), lambda i, h: (0, h)),   # streamed w_in tile
            pl.BlockSpec((1, th), lambda i, h: (0, h)),     # b_in tile
            pl.BlockSpec((th, dim), lambda i, h: (h, 0)),   # streamed w_out tile
            pl.BlockSpec((1, dim), lambda i, h: (0, 0)),    # b_out (resident)
        ],
        out_specs=pl.BlockSpec((tm, dim), lambda i, h: (i, 0)),  # revisited across hidden axis
        scratch_shapes=[pltpu.VMEM((tm, dim), jnp.float32)],
        compiler_params=pltpu.CompilerParams(
            dimension_semantics=("parallel", "arbitrary"),
            vmem_limit_bytes=vmem_limit),
        cost_estimate=cost,
    )(x2d, w_in_c, b_in2d, w_out_c, b_out2d)

    return out.reshape(*lead, dim)


def _reference(x, w_in, b_in, w_out, b_out, compute_dtype):
    """Pure-JAX reference mirroring the kernel's dtype path (f32 accumulation)."""
    f32 = jnp.float32
    dim = x.shape[-1]
    xc = x.reshape(-1, dim).astype(compute_dtype).astype(f32)
    wi = w_in.astype(compute_dtype).astype(f32)
    wo = w_out.astype(compute_dtype).astype(f32)
    h = jnp.dot(xc, wi, precision=lax.Precision.HIGHEST) + b_in.astype(f32)
    g = 0.5 * h * (1.0 + lax.erf(h * (1.0 / math.sqrt(2.0))))
    g = g.astype(compute_dtype).astype(f32)
    out = jnp.dot(g, wo, precision=lax.Precision.HIGHEST) + b_out.astype(f32)
    return out.astype(x.dtype).reshape(x.shape)


if __name__ == "__main__":
    # Small shapes consistent with FeedForward: hidden_dim = 4 * dim.
    B, S, DIM = 2, 8, 128
    HIDDEN = DIM * 4  # 512

    key = jax.random.PRNGKey(0)
    kx, k1, k2, k3, k4, kx2 = jax.random.split(key, 6)

    x = jax.random.normal(kx, (B, S, DIM), dtype=jnp.float32)
    # Deterministic synthetic parameters (skip_init -> no checkpoint anyway).
    w_in = jax.random.normal(k1, (DIM, HIDDEN), dtype=jnp.float32) * 0.02
    b_in = jax.random.normal(k2, (HIDDEN,), dtype=jnp.float32) * 0.02
    w_out = jax.random.normal(k3, (HIDDEN, DIM), dtype=jnp.float32) * 0.02
    b_out = jax.random.normal(k4, (DIM,), dtype=jnp.float32) * 0.02

    # 1) Default path: bf16 MXU feeds, f32 accumulation, auto (VMEM-budgeted) tiling.
    y = feed_forward(x, w_in, b_in, w_out, b_out)
    jax.block_until_ready(y)
    y_ref = _reference(x, w_in, b_in, w_out, b_out, jnp.bfloat16)
    assert jnp.allclose(y, y_ref, atol=2e-3, rtol=2e-3), "mismatch vs reference (bf16 path)"

    # 2) f32 path with forced ragged tiling: partial last row tile (m=144, tm=64) and a
    #    ragged last hidden tile (hidden=512, th=384) exercise the boundary / tail masking
    #    and the multi-step accumulator writeback.
    x2 = jax.random.normal(kx2, (2, 72, DIM), dtype=jnp.float32)
    y2 = feed_forward(x2, w_in, b_in, w_out, b_out, compute_dtype=jnp.float32, tm=64, th=384)
    jax.block_until_ready(y2)
    y2_ref = _reference(x2, w_in, b_in, w_out, b_out, jnp.float32)
    assert jnp.allclose(y2, y2_ref, atol=5e-3, rtol=5e-3), "mismatch vs reference (f32 ragged path)"

    print("KERNEL_OK")
</pallas_src>

<mosaic_0001>
module attributes {stable_mosaic.version = 11 : i64} {
  func.func @_ffn_kernel(%arg0: i32, %arg1: i32, %arg2: memref<16x128xbf16, #tpu.memory_space<vmem>>, %arg3: memref<128x512xbf16, #tpu.memory_space<vmem>>, %arg4: memref<1x512xf32, #tpu.memory_space<vmem>>, %arg5: memref<512x128xbf16, #tpu.memory_space<vmem>>, %arg6: memref<1x128xf32, #tpu.memory_space<vmem>>, %arg7: memref<16x128xf32, #tpu.memory_space<vmem>>, %arg8: memref<16x128xf32, #tpu.memory_space<vmem>>) attributes {dimension_semantics = [#tpu.dimension_semantics<parallel>, #tpu.dimension_semantics<arbitrary>], iteration_bounds = array<i64: 1, 1>, scalar_prefetch = 0 : i64, scratch_operands = 1 : i64, tpu.core_type = #tpu.core_type<tc>, window_params = [{transform_indices = @transform_0, window_bounds = array<i64: 16, 128>}, {transform_indices = @transform_1, window_bounds = array<i64: 128, 512>}, {transform_indices = @transform_2, window_bounds = array<i64: 1, 512>}, {transform_indices = @transform_3, window_bounds = array<i64: 512, 128>}, {pipeline_mode = #tpu.pipeline_mode<synchronous>, transform_indices = @transform_4, window_bounds = array<i64: 1, 128>}, {transform_indices = @transform_5, window_bounds = array<i64: 16, 128>}]} {
    %c0_i32 = arith.constant 0 : i32
    %0 = arith.cmpi eq, %arg1, %c0_i32 : i32
    %1 = arith.extui %0 : i1 to i32
    %c0_i32_0 = arith.constant 0 : i32
    %2 = arith.cmpi ne, %1, %c0_i32_0 : i32
    scf.if %2 {
      %cst_18 = arith.constant 0.000000e+00 : f32
      %26 = vector.broadcast %cst_18 : f32 to vector<16x128xf32>
      %c0_19 = arith.constant 0 : index
      %c0_20 = arith.constant 0 : index
      %27 = vector.load %arg8[%c0_19, %c0_20] : memref<16x128xf32, #tpu.memory_space<vmem>>, vector<16x128xf32>
      tpu.vector_store %arg8[%c0_19, %c0_20], %26 {strides = array<i32>} : memref<16x128xf32, #tpu.memory_space<vmem>>, vector<16x128xf32>,
    } else {
    }
    %c0 = arith.constant 0 : index
    %c0_1 = arith.constant 0 : index
    %3 = vector.load %arg2[%c0, %c0_1] : memref<16x128xbf16, #tpu.memory_space<vmem>>, vector<16x128xbf16>
    %c0_2 = arith.constant 0 : index
    %c0_3 = arith.constant 0 : index
    %4 = vector.load %arg3[%c0_2, %c0_3] : memref<128x512xbf16, #tpu.memory_space<vmem>>, vector<128x512xbf16>
    %cst = arith.constant dense<0.000000e+00> : vector<16x512xf32>
    %5 = tpu.matmul %3, %4, %cst {dimension_numbers = #tpu.dot_dimension_numbers<[1], [0], [0], [1], [0, 0, 1, 1], [], []>} : vector<16x128xbf16>, vector<128x512xbf16>, vector<16x512xf32> -> vector<16x512xf32>
    %c0_4 = arith.constant 0 : index
    %c0_5 = arith.constant 0 : index
    %6 = vector.load %arg4[%c0_4, %c0_5] : memref<1x512xf32, #tpu.memory_space<vmem>>, vector<1x512xf32>
    %7 = vector.broadcast %6 : vector<1x512xf32> to vector<16x512xf32>
    %8 = arith.addf %5, %7 : vector<16x512xf32>
    %cst_6 = arith.constant 5.000000e-01 : f32
    %9 = vector.broadcast %cst_6 : f32 to vector<16x512xf32>
    %10 = arith.mulf %9, %8 : vector<16x512xf32>
    %cst_7 = arith.constant 0.707106769 : f32
    %11 = vector.broadcast %cst_7 : f32 to vector<16x512xf32>
    %12 = arith.mulf %8, %11 : vector<16x512xf32>
    %13 = math.erf %12 : vector<16x512xf32>
    %cst_8 = arith.constant 1.000000e+00 : f32
    %14 = vector.broadcast %cst_8 : f32 to vector<16x512xf32>
    %15 = arith.addf %14, %13 : vector<16x512xf32>
    %16 = arith.mulf %10, %15 : vector<16x512xf32>
    %c0_9 = arith.constant 0 : index
    %c0_10 = arith.constant 0 : index
    %17 = vector.load %arg5[%c0_9, %c0_10] : memref<512x128xbf16, #tpu.memory_space<vmem>>, vector<512x128xbf16>
    %c0_11 = arith.constant 0 : index
    %c0_12 = arith.constant 0 : index
    %18 = vector.load %arg8[%c0_11, %c0_12] : memref<16x128xf32, #tpu.memory_space<vmem>>, vector<16x128xf32>
    %19 = arith.truncf %16 : vector<16x512xf32> to vector<16x512xbf16>
    %cst_13 = arith.constant dense<0.000000e+00> : vector<16x128xf32>
    %20 = tpu.matmul %19, %17, %cst_13 {dimension_numbers = #tpu.dot_dimension_numbers<[1], [0], [0], [1], [0, 0, 1, 1], [], []>} : vector<16x512xbf16>, vector<512x128xbf16>, vector<16x128xf32> -> vector<16x128xf32>
    %21 = arith.addf %18, %20 : vector<16x128xf32>
    %c0_14 = arith.constant 0 : index
    %c0_15 = arith.constant 0 : index
    %22 = vector.load %arg8[%c0_14, %c0_15] : memref<16x128xf32, #tpu.memory_space<vmem>>, vector<16x128xf32>
    tpu.vector_store %arg8[%c0_14, %c0_15], %21 {strides = array<i32>} : memref<16x128xf32, #tpu.memory_space<vmem>>, vector<16x128xf32>,
    %c0_i32_16 = arith.constant 0 : i32
    %23 = arith.cmpi eq, %arg1, %c0_i32_16 : i32
    %24 = arith.extui %23 : i1 to i32
    %c0_i32_17 = arith.constant 0 : i32
    %25 = arith.cmpi ne, %24, %c0_i32_17 : i32
    scf.if %25 {
      %c0_18 = arith.constant 0 : index
      %c0_19 = arith.constant 0 : index
      %26 = vector.load %arg8[%c0_18, %c0_19] : memref<16x128xf32, #tpu.memory_space<vmem>>, vector<16x128xf32>
      %c0_20 = arith.constant 0 : index
      %c0_21 = arith.constant 0 : index
      %27 = vector.load %arg6[%c0_20, %c0_21] : memref<1x128xf32, #tpu.memory_space<vmem>>, vector<1x128xf32>
      %28 = vector.broadcast %27 : vector<1x128xf32> to vector<16x128xf32>
      %29 = arith.addf %26, %28 : vector<16x128xf32>
      %c0_22 = arith.constant 0 : index
      %c0_23 = arith.constant 0 : index
      %30 = vector.load %arg7[%c0_22, %c0_23] : memref<16x128xf32, #tpu.memory_space<vmem>>, vector<16x128xf32>
      tpu.vector_store %arg7[%c0_22, %c0_23], %29 {strides = array<i32>} : memref<16x128xf32, #tpu.memory_space<vmem>>, vector<16x128xf32>,
    } else {
    }
    return
  }
  func.func @transform_0(%arg0: i32, %arg1: i32) -> (i32, i32) {
    %c0_i32 = arith.constant 0 : i32
    %c0_i32_0 = arith.constant 0 : i32
    return %arg0, %c0_i32 : i32, i32
  }
  func.func @transform_1(%arg0: i32, %arg1: i32) -> (i32, i32) {
    %c0_i32 = arith.constant 0 : i32
    %c0_i32_0 = arith.constant 0 : i32
    return %c0_i32, %arg1 : i32, i32
  }
  func.func @transform_2(%arg0: i32, %arg1: i32) -> (i32, i32) {
    %c0_i32 = arith.constant 0 : i32
    %c0_i32_0 = arith.constant 0 : i32
    return %c0_i32, %arg1 : i32, i32
  }
  func.func @transform_3(%arg0: i32, %arg1: i32) -> (i32, i32) {
    %c0_i32 = arith.constant 0 : i32
    %c0_i32_0 = arith.constant 0 : i32
    return %arg1, %c0_i32 : i32, i32
  }
  func.func @transform_4(%arg0: i32, %arg1: i32) -> (i32, i32) {
    %c0_i32 = arith.constant 0 : i32
    %c0_i32_0 = arith.constant 0 : i32
    %c0_i32_1 = arith.constant 0 : i32
    return %c0_i32, %c0_i32_0 : i32, i32
  }
  func.func @transform_5(%arg0: i32, %arg1: i32) -> (i32, i32) {
    %c0_i32 = arith.constant 0 : i32
    %c0_i32_0 = arith.constant 0 : i32
    return %arg0, %c0_i32 : i32, i32
  }
}

</mosaic_0001>

<llo_original>
// kernel: tpu_custom_call.1
$region0: #{tpu_custom_call.1}
  #allocation0 [shape = 'u32[]', space=smem, size = 0x4, offset = 0x4, fixed_abs, tag = 'smem constant byte address 0x4 - core index']
  #allocation1 [shape = 'u32[144,128]{1,0:T(1,128)}', space=vmem, size = 0x12000, scoped, tag = 'internal scratch']
  #allocation2 [shape = 'f32[16,128]{1,0:T(8,128)}', space=vmem, size = 0x2000, scoped, tag = 'scratch operand']
  %s0 = inlined_call_operand.hbm [shape: bf16[16,128], index: 0, kind: input, shape index: {}]
  %s1 = inlined_call_operand.hbm [shape: bf16[128,512], index: 1, kind: input, shape index: {}]
  %s2 = inlined_call_operand.vmem [shape: f32[1,512], index: 2, kind: input, shape index: {}]
  %s3 = inlined_call_operand.hbm [shape: bf16[512,128], index: 3, kind: input, shape index: {}]
  %s4 = inlined_call_operand.vmem [shape: f32[1,128], index: 4, kind: input, shape index: {}]
  %s5 = inlined_call_operand.hbm [shape: f32[16,128], index: 5, kind: output, shape index: {}]
  %s6 = sld [smem:[#allocation0]]
  $region50: #{tpu_custom_call.1} parent=0
    _
  %s8 = ssub.s32 1, %s6
  %s9 = scalar_select 0, %s8, %s6
  $region1: #{tpu_custom_call.1} parent=0
    #allocation3 [shape = 'u8[4096]{0}', space=vmem, size = 0x1000, scoped, tag = 'input window, operand 0, single buffered']
    #allocation4 [shape = 's32[1]{0}', space=sflag, size = 0x4, scoped, tag = 'scoped memory for tpu_custom_call.1']
    #allocation5 [shape = 's32[1]{0}', space=sflag, size = 0x4, scoped, tag = 'scoped memory for tpu_custom_call.1']
    #allocation6 [shape = 'u8[131072]{0}', space=vmem, size = 0x20000, scoped, tag = 'input window, operand 1, single buffered']
    #allocation7 [shape = 's32[1]{0}', space=sflag, size = 0x4, scoped, tag = 'scoped memory for tpu_custom_call.1']
    #allocation8 [shape = 'u8[131072]{0}', space=vmem, size = 0x20000, scoped, tag = 'input window, operand 3, single buffered']
    #allocation9 [shape = 'u8[8192]{0}', space=vmem, size = 0x2000, scoped, tag = 'output window, operand 0, single buffered']
    %10 = vsyncpa [#allocation4], 0
    %11 = vsyncpa [#allocation7], 0
    %12 = vsyncpa [#allocation5], 0
    // Predicated region
    $region2: #{tpu_custom_call.1} parent=1 // pred_check
      _
    $region3: #{tpu_custom_call.1} parent=1 // pred_check_branch
      %14 = sbr.rel (0) target = $region5
    $region4: #{tpu_custom_call.1} parent=1 // pred_region
      %s16 = ssub.s32 128, 128
      %17 = vsyncadd [#allocation4], %s16
      %s18 = sshll.u32 [#allocation3], 4
      %s19 = int_to_ptr.vmem [resolvable:$true] %s18
      %24 = dma.hbm_to_vmem [thread:$0]  %s0, 128, %s19, [#allocation4], 64, 64, 4
    $region5: #{tpu_custom_call.1} parent=1 // pred_fallthru
      _
    // Predicated region
    $region6: #{tpu_custom_call.1} parent=1 // pred_check
      _
    $region7: #{tpu_custom_call.1} parent=1 // pred_check_branch
      %26 = sbr.rel (0) target = $region9
    $region8: #{tpu_custom_call.1} parent=1 // pred_region
      %s28 = ssub.s32 4096, 4096
      %29 = vsyncadd [#allocation7], %s28
      %s30 = sshll.u32 [#allocation6], 4
      %s31 = int_to_ptr.vmem [resolvable:$true] %s30
      %36 = dma.hbm_to_vmem [thread:$0]  %s1, 4096, %s31, [#allocation7], 256, 256, 16
    $region9: #{tpu_custom_call.1} parent=1 // pred_fallthru
      _
    // Predicated region
    $region10: #{tpu_custom_call.1} parent=1 // pred_check
      _
    $region11: #{tpu_custom_call.1} parent=1 // pred_check_branch
      %38 = sbr.rel (0) target = $region13
    $region12: #{tpu_custom_call.1} parent=1 // pred_region
      _
    $region13: #{tpu_custom_call.1} parent=1 // pred_fallthru
      _
    // Predicated region
    $region14: #{tpu_custom_call.1} parent=1 // pred_check
      _
    $region15: #{tpu_custom_call.1} parent=1 // pred_check_branch
      %40 = sbr.rel (0) target = $region17
    $region16: #{tpu_custom_call.1} parent=1 // pred_region
      %s42 = ssub.s32 4096, 4096
      %43 = vsyncadd [#allocation7], %s42
      %s44 = sshll.u32 [#allocation8], 4
      %s45 = int_to_ptr.vmem [resolvable:$true] %s44
      %50 = dma.hbm_to_vmem [thread:$0]  %s3, 4096, %s45, [#allocation7], 64, 64, 4
    $region17: #{tpu_custom_call.1} parent=1 // pred_fallthru
      _
    // Predicated region
    $region18: #{tpu_custom_call.1} parent=1 // pred_check
      _
    $region19: #{tpu_custom_call.1} parent=1 // pred_check_branch
      %52 = sbr.rel (0) target = $region21
    $region20: #{tpu_custom_call.1} parent=1 // pred_region
      _
    $region21: #{tpu_custom_call.1} parent=1 // pred_fallthru
      _
    // Predicated region
    $region22: #{tpu_custom_call.1} parent=1 // pred_check
      _
    $region23: #{tpu_custom_call.1} parent=1 // pred_check_branch
      %54 = sbr.rel (0) target = $region25
    $region24: #{tpu_custom_call.1} parent=1 // pred_region
      %55 = dma.done [#allocation4], 128
    $region25: #{tpu_custom_call.1} parent=1 // pred_fallthru
      _
    // Predicated region
    $region26: #{tpu_custom_call.1} parent=1 // pred_check
      _
    $region27: #{tpu_custom_call.1} parent=1 // pred_check_branch
      %57 = sbr.rel (0) target = $region29
    $region28: #{tpu_custom_call.1} parent=1 // pred_region
      %58 = dma.done [#allocation7], 4096
    $region29: #{tpu_custom_call.1} parent=1 // pred_fallthru
      _
    // Predicated region
    $region30: #{tpu_custom_call.1} parent=1 // pred_check
      _
    $region31: #{tpu_custom_call.1} parent=1 // pred_check_branch
      %60 = sbr.rel (0) target = $region33
    $region32: #{tpu_custom_call.1} parent=1 // pred_region
      %61 = dma.done [#allocation7], 4096
    $region33: #{tpu_custom_call.1} parent=1 // pred_fallthru
      _
    %p63 = scmp.eq.s32.totalorder 0, 0
    // Predicated region
    $region34: #{tpu_custom_call.1} parent=1 // pred_check
      %p64 = pneg %p63
    $region35: #{tpu_custom_call.1} parent=1 // pred_check_branch
      %66 = sbr.rel (%p64) target = $region37
    $region36: #{tpu_custom_call.1} parent=1 // pred_region
      %67 = vst [vmem:[#allocation2] sm:$0xff] 0.0
      %68 = vst [vmem:[#allocation2 + $0x8] sm:$0xff] 0.0
    $region37: #{tpu_custom_call.1} parent=1 // pred_fallthru
      _
    %v69 = vld [vmem:[#allocation3] sm:$0xf]
    %v70 = vld [vmem:[#allocation3 + $0x4] sm:$0xf]
    %v71 = vld [vmem:[#allocation6] sm:$0xff]
    %v72 = vld [vmem:[#allocation6 + $0x8] sm:$0xff]
    %v73 = vld [vmem:[#allocation6 + $0x10] sm:$0xff]
    %v74 = vld [vmem:[#allocation6 + $0x18] sm:$0xff]
    %v75 = vld [vmem:[#allocation6 + $0x20] sm:$0xff]
    %v76 = vld [vmem:[#allocation6 + $0x28] sm:$0xff]
    %v77 = vld [vmem:[#allocation6 + $0x30] sm:$0xff]
    %v78 = vld [vmem:[#allocation6 + $0x38] sm:$0xff]
    %v79 = vld [vmem:[#allocation6 + $0x40] sm:$0xff]
    %v80 = vld [vmem:[#allocation6 + $0x48] sm:$0xff]
    %v81 = vld [vmem:[#allocation6 + $0x50] sm:$0xff]
    %v82 = vld [vmem:[#allocation6 + $0x58] sm:$0xff]
    %v83 = vld [vmem:[#allocation6 + $0x60] sm:$0xff]
    %v84 = vld [vmem:[#allocation6 + $0x68] sm:$0xff]
    %v85 = vld [vmem:[#allocation6 + $0x70] sm:$0xff]
    %v86 = vld [vmem:[#allocation6 + $0x78] sm:$0xff]
    %v87 = vld [vmem:[#allocation6 + $0x80] sm:$0xff]
    %v88 = vld [vmem:[#allocation6 + $0x88] sm:$0xff]
    %v89 = vld [vmem:[#allocation6 + $0x90] sm:$0xff]
    %v90 = vld [vmem:[#allocation6 + $0x98] sm:$0xff]
    %v91 = vld [vmem:[#allocation6 + $0xa0] sm:$0xff]
    %v92 = vld [vmem:[#allocation6 + $0xa8] sm:$0xff]
    %v93 = vld [vmem:[#allocation6 + $0xb0] sm:$0xff]
    %v94 = vld [vmem:[#allocation6 + $0xb8] sm:$0xff]
    %v95 = vld [vmem:[#allocation6 + $0xc0] sm:$0xff]
    %v96 = vld [vmem:[#allocation6 + $0xc8] sm:$0xff]
    %v97 = vld [vmem:[#allocation6 + $0xd0] sm:$0xff]
    %v98 = vld [vmem:[#allocation6 + $0xd8] sm:$0xff]
    %v99 = vld [vmem:[#allocation6 + $0xe0] sm:$0xff]
    %v100 = vld [vmem:[#allocation6 + $0xe8] sm:$0xff]
    %v101 = vld [vmem:[#allocation6 + $0xf0] sm:$0xff]
    %v102 = vld [vmem:[#allocation6 + $0xf8] sm:$0xff]
    %v103 = vld [vmem:[%s2] sm:$0xf]
    %v105 = vlaneseq
    %v106 = vshrl.u32 %v105, 7
    %v107 = vsub.s32 0, %v106
    %v108 = vrot.slane %v103, %v107
    %v109 = vlaneseq
    %v110 = vshrl.u32 %v109, 7
    %v111 = vsub.s32 1, %v110
    %v112 = vrot.slane %v103, %v111
    %v113 = vlaneseq
    %v114 = vshrl.u32 %v113, 7
    %v115 = vsub.s32 2, %v114
    %v116 = vrot.slane %v103, %v115
    %v117 = vlaneseq
    %v118 = vshrl.u32 %v117, 7
    %v119 = vsub.s32 3, %v118
    %v120 = vrot.slane %v103, %v119
    %v127 = vunpack.c.l.b16 %v69
    %v128 = vunpack.c.l.b16 %v70
    %v129 = vpack.c.b16 %v128, %v127
    %v163 = vunpack.c.l.b16 %v71
    %v164 = vunpack.c.h.b16 %v71
    %v165 = vunpack.c.l.b16 %v72
    %v166 = vunpack.c.h.b16 %v72
    %v167 = vunpack.c.l.b16 %v73
    %v168 = vunpack.c.h.b16 %v73
    %v169 = vunpack.c.l.b16 %v74
    %v170 = vunpack.c.h.b16 %v74
    %v171 = vunpack.c.l.b16 %v75
    %v172 = vunpack.c.h.b16 %v75
    %v173 = vunpack.c.l.b16 %v76
    %v174 = vunpack.c.h.b16 %v76
    %v175 = vunpack.c.l.b16 %v77
    %v176 = vunpack.c.h.b16 %v77
    %v177 = vunpack.c.l.b16 %v78
    %v178 = vunpack.c.h.b16 %v78
    %v179 = vunpack.c.l.b16 %v79
    %v180 = vunpack.c.h.b16 %v79
    %v181 = vunpack.c.l.b16 %v80
    %v182 = vunpack.c.h.b16 %v80
    %v183 = vunpack.c.l.b16 %v81
    %v184 = vunpack.c.h.b16 %v81
    %v185 = vunpack.c.l.b16 %v82
    %v186 = vunpack.c.h.b16 %v82
    %v187 = vunpack.c.l.b16 %v83
    %v188 = vunpack.c.h.b16 %v83
    %v189 = vunpack.c.l.b16 %v84
    %v190 = vunpack.c.h.b16 %v84
    %v191 = vunpack.c.l.b16 %v85
    %v192 = vunpack.c.h.b16 %v85
    %v193 = vunpack.c.l.b16 %v86
    %v194 = vunpack.c.h.b16 %v86
    %v195 = vunpack.c.l.b16 %v87
    %v196 = vunpack.c.h.b16 %v87
    %v197 = vunpack.c.l.b16 %v88
    %v198 = vunpack.c.h.b16 %v88
    %v199 = vunpack.c.l.b16 %v89
    %v200 = vunpack.c.h.b16 %v89
    %v201 = vunpack.c.l.b16 %v90
    %v202 = vunpack.c.h.b16 %v90
    %v203 = vunpack.c.l.b16 %v91
    %v204 = vunpack.c.h.b16 %v91
    %v205 = vunpack.c.l.b16 %v92
    %v206 = vunpack.c.h.b16 %v92
    %v207 = vunpack.c.l.b16 %v93
    %v208 = vunpack.c.h.b16 %v93
    %v209 = vunpack.c.l.b16 %v94
    %v210 = vunpack.c.h.b16 %v94
    %v211 = vunpack.c.l.b16 %v95
    %v212 = vunpack.c.h.b16 %v95
    %v213 = vunpack.c.l.b16 %v96
    %v214 = vunpack.c.h.b16 %v96
    %v215 = vunpack.c.l.b16 %v97
    %v216 = vunpack.c.h.b16 %v97
    %v217 = vunpack.c.l.b16 %v98
    %v218 = vunpack.c.h.b16 %v98
    %v219 = vunpack.c.l.b16 %v99
    %v220 = vunpack.c.h.b16 %v99
    %v221 = vunpack.c.l.b16 %v100
    %v222 = vunpack.c.h.b16 %v100
    %v223 = vunpack.c.l.b16 %v101
    %v224 = vunpack.c.h.b16 %v101
    %v225 = vunpack.c.l.b16 %v102
    %v226 = vunpack.c.h.b16 %v102
    %v227 = vpack.c.b16 %v167, %v163
    %v228 = vpack.c.b16 %v168, %v164
    %v229 = vpack.c.b16 %v169, %v165
    %v230 = vpack.c.b16 %v170, %v166
    %v231 = vpack.c.b16 %v175, %v171
    %v232 = vpack.c.b16 %v176, %v172
    %v233 = vpack.c.b16 %v177, %v173
    %v234 = vpack.c.b16 %v178, %v174
    %v235 = vpack.c.b16 %v183, %v179
    %v236 = vpack.c.b16 %v184, %v180
    %v237 = vpack.c.b16 %v185, %v181
    %v238 = vpack.c.b16 %v186, %v182
    %v239 = vpack.c.b16 %v191, %v187
    %v240 = vpack.c.b16 %v192, %v188
    %v241 = vpack.c.b16 %v193, %v189
    %v242 = vpack.c.b16 %v194, %v190
    %v243 = vpack.c.b16 %v199, %v195
    %v244 = vpack.c.b16 %v200, %v196
    %v245 = vpack.c.b16 %v201, %v197
    %v246 = vpack.c.b16 %v202, %v198
    %v247 = vpack.c.b16 %v207, %v203
    %v248 = vpack.c.b16 %v208, %v204
    %v249 = vpack.c.b16 %v209, %v205
    %v250 = vpack.c.b16 %v210, %v206
    %v251 = vpack.c.b16 %v215, %v211
    %v252 = vpack.c.b16 %v216, %v212
    %v253 = vpack.c.b16 %v217, %v213
    %v254 = vpack.c.b16 %v218, %v214
    %v255 = vpack.c.b16 %v223, %v219
    %v256 = vpack.c.b16 %v224, %v220
    %v257 = vpack.c.b16 %v225, %v221
    %v258 = vpack.c.b16 %v226, %v222
    %291 = vmatprep.subr.bf16.mxu0 %v228
    %292 = vmatpush1.bf16.msra.mxu0 %v227
    %293 = vmatprep.subr.bf16.mxu0 %v232
    %294 = vmatpush1.bf16.msra.mxu0 %v231
    %295 = vmatprep.subr.bf16.mxu0 %v236
    %296 = vmatpush1.bf16.msra.mxu0 %v235
    %297 = vmatprep.subr.bf16.mxu0 %v240
    %298 = vmatpush1.bf16.msra.mxu0 %v239
    %299 = vmatprep.subr.bf16.mxu0 %v244
    %300 = vmatpush1.bf16.msra.mxu0 %v243
    %301 = vmatprep.subr.bf16.mxu0 %v248
    %302 = vmatpush1.bf16.msra.mxu0 %v247
    %303 = vmatprep.subr.bf16.mxu0 %v252
    %304 = vmatpush1.bf16.msra.mxu0 %v251
    %305 = vmatprep.subr.bf16.mxu0 %v256
    %306 = vmatpush1.bf16.msra.mxu0 %v255
    %307 = vmatprep.subr.bf16.mxu0 0
    %308 = vmatpush1.bf16.msra.mxu0 0
    %309 = vmatprep.subr.bf16.mxu0 0
    %310 = vmatpush1.bf16.msra.mxu0 0
    %311 = vmatprep.subr.bf16.mxu0 0
    %312 = vmatpush1.bf16.msra.mxu0 0
    %313 = vmatprep.subr.bf16.mxu0 0
    %314 = vmatpush1.bf16.msra.mxu0 0
    %315 = vmatprep.subr.bf16.mxu0 0
    %316 = vmatpush1.bf16.msra.mxu0 0
    %317 = vmatprep.subr.bf16.mxu0 0
    %318 = vmatpush1.bf16.msra.mxu0 0
    %319 = vmatprep.subr.bf16.mxu0 0
    %320 = vmatpush1.bf16.msra.mxu0 0
    %321 = vmatprep.subr.bf16.mxu0 0
    %322 = vmatpush1.bf16.msra.mxu0 0
    %323 = vmatprep.mubr.bf16.mxu0 0
    %324 = vmatmul.mubr.bf16.gmra.mrb[0].mxu0 %v129
    %v325 = vpop.f32.mrb[0].mxu0
    %v326 = vadd.f32 %v108, %v325
    %v327 = vpop.f32.mrb[0].mxu0
    %v328 = vadd.f32 %v112, %v327
    %v329 = vpop.f32.mrb[0].mxu0
    %v330 = vadd.f32 %v108, %v329
    %v331 = vpop.f32.mrb[0].mxu0
    %v332 = vadd.f32 %v112, %v331
    %333 = vdwg.mxu0
    %334 = vmatprep.subr.bf16.mxu0 %v230
    %335 = vmatpush1.bf16.msra.mxu0 %v229
    %336 = vmatprep.subr.bf16.mxu0 %v234
    %337 = vmatpush1.bf16.msra.mxu0 %v233
    %338 = vmatprep.subr.bf16.mxu0 %v238
    %339 = vmatpush1.bf16.msra.mxu0 %v237
    %340 = vmatprep.subr.bf16.mxu0 %v242
    %341 = vmatpush1.bf16.msra.mxu0 %v241
    %342 = vmatprep.subr.bf16.mxu0 %v246
    %343 = vmatpush1.bf16.msra.mxu0 %v245
    %344 = vmatprep.subr.bf16.mxu0 %v250
    %345 = vmatpush1.bf16.msra.mxu0 %v249
    %346 = vmatprep.subr.bf16.mxu0 %v254
    %347 = vmatpush1.bf16.msra.mxu0 %v253
    %348 = vmatprep.subr.bf16.mxu0 %v258
    %349 = vmatpush1.bf16.msra.mxu0 %v257
    %350 = vmatprep.subr.bf16.mxu0 0
    %351 = vmatpush1.bf16.msra.mxu0 0
    %352 = vmatprep.subr.bf16.mxu0 0
    %353 = vmatpush1.bf16.msra.mxu0 0
    %354 = vmatprep.subr.bf16.mxu0 0
    %355 = vmatpush1.bf16.msra.mxu0 0
    %356 = vmatprep.subr.bf16.mxu0 0
    %357 = vmatpush1.bf16.msra.mxu0 0
    %358 = vmatprep.subr.bf16.mxu0 0
    %359 = vmatpush1.bf16.msra.mxu0 0
    %360 = vmatprep.subr.bf16.mxu0 0
    %361 = vmatpush1.bf16.msra.mxu0 0
    %362 = vmatprep.subr.bf16.mxu0 0
    %363 = vmatpush1.bf16.msra.mxu0 0
    %364 = vmatprep.subr.bf16.mxu0 0
    %365 = vmatpush1.bf16.msra.mxu0 0
    %366 = vmatprep.mubr.bf16.mxu0 0
    %367 = vmatmul.mubr.bf16.gmra.mrb[0].mxu0 %v129
    %v368 = vpop.f32.mrb[0].mxu0
    %v369 = vadd.f32 %v116, %v368
    %v370 = vpop.f32.mrb[0].mxu0
    %v371 = vadd.f32 %v120, %v370
    %v372 = vpop.f32.mrb[0].mxu0
    %v373 = vadd.f32 %v116, %v372
    %v374 = vpop.f32.mrb[0].mxu0
    %v375 = vadd.f32 %v120, %v374
    %376 = vdwg.mxu0
    %v377 = vmul.f32 %v326, 0.5
    %v378 = vmul.f32 %v328, 0.5
    %v379 = vmul.f32 %v369, 0.5
    %v380 = vmul.f32 %v371, 0.5
    %v381 = vmul.f32 %v330, 0.5
    %v382 = vmul.f32 %v332, 0.5
    %v383 = vmul.f32 %v373, 0.5
    %v384 = vmul.f32 %v375, 0.5
    %v385 = vmul.f32 %v326, 0.70710677
    %v386 = vmul.f32 %v328, 0.70710677
    %v387 = vmul.f32 %v369, 0.70710677
    %v388 = vmul.f32 %v371, 0.70710677
    %v389 = vmul.f32 %v330, 0.70710677
    %v390 = vmul.f32 %v332, 0.70710677
    %v391 = vmul.f32 %v373, 0.70710677
    %v392 = vmul.f32 %v375, 0.70710677
    %v393 = verf.f32.pop %v385
    %v394 = verf.f32.pop %v386
    %v395 = verf.f32.pop %v387
    %v396 = verf.f32.pop %v388
    %v397 = verf.f32.pop %v389
    %v398 = verf.f32.pop %v390
    %v399 = verf.f32.pop %v391
    %v400 = verf.f32.pop %v392
    %v401 = vadd.f32 %v393, 1.0
    %v402 = vadd.f32 %v394, 1.0
    %v403 = vadd.f32 %v395, 1.0
    %v404 = vadd.f32 %v396, 1.0
    %v405 = vadd.f32 %v397, 1.0
    %v406 = vadd.f32 %v398, 1.0
    %v407 = vadd.f32 %v399, 1.0
    %v408 = vadd.f32 %v400, 1.0
    %v409 = vmul.f32 %v377, %v401
    %v410 = vmul.f32 %v378, %v402
    %v411 = vmul.f32 %v379, %v403
    %v412 = vmul.f32 %v380, %v404
    %v413 = vmul.f32 %v381, %v405
    %v414 = vmul.f32 %v382, %v406
    %v415 = vmul.f32 %v383, %v407
    %v416 = vmul.f32 %v384, %v408
    %v417 = vld [vmem:[#allocation8] sm:$0xf]
    %v418 = vld [vmem:[#allocation8 + $0x4] sm:$0xf]
    %v419 = vld [vmem:[#allocation8 + $0x8] sm:$0xf]
    %v420 = vld [vmem:[#allocation8 + $0xc] sm:$0xf]
    %v421 = vld [vmem:[#allocation8 + $0x10] sm:$0xf]
    %v422 = vld [vmem:[#allocation8 + $0x14] sm:$0xf]
    %v423 = vld [vmem:[#allocation8 + $0x18] sm:$0xf]
    %v424 = vld [vmem:[#allocation8 + $0x1c] sm:$0xf]
    %v425 = vld [vmem:[#allocation8 + $0x20] sm:$0xf]
    %v426 = vld [vmem:[#allocation8 + $0x24] sm:$0xf]
    %v427 = vld [vmem:[#allocation8 + $0x28] sm:$0xf]
    %v428 = vld [vmem:[#allocation8 + $0x2c] sm:$0xf]
    %v429 = vld [vmem:[#allocation8 + $0x30] sm:$0xf]
    %v430 = vld [vmem:[#allocation8 + $0x34] sm:$0xf]
    %v431 = vld [vmem:[#allocation8 + $0x38] sm:$0xf]
    %v432 = vld [vmem:[#allocation8 + $0x3c] sm:$0xf]
    %v433 = vld [vmem:[#allocation8 + $0x40] sm:$0xf]
    %v434 = vld [vmem:[#allocation8 + $0x44] sm:$0xf]
    %v435 = vld [vmem:[#allocation8 + $0x48] sm:$0xf]
    %v436 = vld [vmem:[#allocation8 + $0x4c] sm:$0xf]
    %v437 = vld [vmem:[#allocation8 + $0x50] sm:$0xf]
    %v438 = vld [vmem:[#allocation8 + $0x54] sm:$0xf]
    %v439 = vld [vmem:[#allocation8 + $0x58] sm:$0xf]
    %v440 = vld [vmem:[#allocation8 + $0x5c] sm:$0xf]
    %v441 = vld [vmem:[#allocation8 + $0x60] sm:$0xf]
    %v442 = vld [vmem:[#allocation8 + $0x64] sm:$0xf]
    %v443 = vld [vmem:[#allocation8 + $0x68] sm:$0xf]
    %v444 = vld [vmem:[#allocation8 + $0x6c] sm:$0xf]
    %v445 = vld [vmem:[#allocation8 + $0x70] sm:$0xf]
    %v446 = vld [vmem:[#allocation8 + $0x74] sm:$0xf]
    %v447 = vld [vmem:[#allocation8 + $0x78] sm:$0xf]
    %v448 = vld [vmem:[#allocation8 + $0x7c] sm:$0xf]
    %v449 = vld [vmem:[#allocation8 + $0x80] sm:$0xf]
    %v450 = vld [vmem:[#allocation8 + $0x84] sm:$0xf]
    %v451 = vld [vmem:[#allocation8 + $0x88] sm:$0xf]
    %v452 = vld [vmem:[#allocation8 + $0x8c] sm:$0xf]
    %v453 = vld [vmem:[#allocation8 + $0x90] sm:$0xf]
    %v454 = vld [vmem:[#allocation8 + $0x94] sm:$0xf]
    %v455 = vld [vmem:[#allocation8 + $0x98] sm:$0xf]
    %v456 = vld [vmem:[#allocation8 + $0x9c] sm:$0xf]
    %v457 = vld [vmem:[#allocation8 + $0xa0] sm:$0xf]
    %v458 = vld [vmem:[#allocation8 + $0xa4] sm:$0xf]
    %v459 = vld [vmem:[#allocation8 + $0xa8] sm:$0xf]
    %v460 = vld [vmem:[#allocation8 + $0xac] sm:$0xf]
    %v461 = vld [vmem:[#allocation8 + $0xb0] sm:$0xf]
    %v462 = vld [vmem:[#allocation8 + $0xb4] sm:$0xf]
    %v463 = vld [vmem:[#allocation8 + $0xb8] sm:$0xf]
    %v464 = vld [vmem:[#allocation8 + $0xbc] sm:$0xf]
    %v465 = vld [vmem:[#allocation8 + $0xc0] sm:$0xf]
    %v466 = vld [vmem:[#allocation8 + $0xc4] sm:$0xf]
    %v467 = vld [vmem:[#allocation8 + $0xc8] sm:$0xf]
    %v468 = vld [vmem:[#allocation8 + $0xcc] sm:$0xf]
    %v469 = vld [vmem:[#allocation8 + $0xd0] sm:$0xf]
    %v470 = vld [vmem:[#allocation8 + $0xd4] sm:$0xf]
    %v471 = vld [vmem:[#allocation8 + $0xd8] sm:$0xf]
    %v472 = vld [vmem:[#allocation8 + $0xdc] sm:$0xf]
    %v473 = vld [vmem:[#allocation8 + $0xe0] sm:$0xf]
    %v474 = vld [vmem:[#allocation8 + $0xe4] sm:$0xf]
    %v475 = vld [vmem:[#allocation8 + $0xe8] sm:$0xf]
    %v476 = vld [vmem:[#allocation8 + $0xec] sm:$0xf]
    %v477 = vld [vmem:[#allocation8 + $0xf0] sm:$0xf]
    %v478 = vld [vmem:[#allocation8 + $0xf4] sm:$0xf]
    %v479 = vld [vmem:[#allocation8 + $0xf8] sm:$0xf]
    %v480 = vld [vmem:[#allocation8 + $0xfc] sm:$0xf]
    %v481 = vld [vmem:[#allocation2] sm:$0xff]
    %v482 = vld [vmem:[#allocation2 + $0x8] sm:$0xff]
    %v483 = vpack.c.bf16 %v413, %v409
    %v484 = vpack.c.bf16 %v414, %v410
    %v485 = vpack.c.bf16 %v415, %v411
    %v486 = vpack.c.bf16 %v416, %v412
    %v551 = vunpack.c.l.b16 %v417
    %v552 = vunpack.c.l.b16 %v418
    %v553 = vunpack.c.l.b16 %v419
    %v554 = vunpack.c.l.b16 %v420
    %v555 = vunpack.c.l.b16 %v421
    %v556 = vunpack.c.l.b16 %v422
    %v557 = vunpack.c.l.b16 %v423
    %v558 = vunpack.c.l.b16 %v424
    %v559 = vunpack.c.l.b16 %v425
    %v560 = vunpack.c.l.b16 %v426
    %v561 = vunpack.c.l.b16 %v427
    %v562 = vunpack.c.l.b16 %v428
    %v563 = vunpack.c.l.b16 %v429
    %v564 = vunpack.c.l.b16 %v430
    %v565 = vunpack.c.l.b16 %v431
    %v566 = vunpack.c.l.b16 %v432
    %v567 = vunpack.c.l.b16 %v433
    %v568 = vunpack.c.l.b16 %v434
    %v569 = vunpack.c.l.b16 %v435
    %v570 = vunpack.c.l.b16 %v436
    %v571 = vunpack.c.l.b16 %v437
    %v572 = vunpack.c.l.b16 %v438
    %v573 = vunpack.c.l.b16 %v439
    %v574 = vunpack.c.l.b16 %v440
    %v575 = vunpack.c.l.b16 %v441
    %v576 = vunpack.c.l.b16 %v442
    %v577 = vunpack.c.l.b16 %v443
    %v578 = vunpack.c.l.b16 %v444
    %v579 = vunpack.c.l.b16 %v445
    %v580 = vunpack.c.l.b16 %v446
    %v581 = vunpack.c.l.b16 %v447
    %v582 = vunpack.c.l.b16 %v448
    %v583 = vunpack.c.l.b16 %v449
    %v584 = vunpack.c.l.b16 %v450
    %v585 = vunpack.c.l.b16 %v451
    %v586 = vunpack.c.l.b16 %v452
    %v587 = vunpack.c.l.b16 %v453
    %v588 = vunpack.c.l.b16 %v454
    %v589 = vunpack.c.l.b16 %v455
    %v590 = vunpack.c.l.b16 %v456
    %v591 = vunpack.c.l.b16 %v457
    %v592 = vunpack.c.l.b16 %v458
    %v593 = vunpack.c.l.b16 %v459
    %v594 = vunpack.c.l.b16 %v460
    %v595 = vunpack.c.l.b16 %v461
    %v596 = vunpack.c.l.b16 %v462
    %v597 = vunpack.c.l.b16 %v463
    %v598 = vunpack.c.l.b16 %v464
    %v599 = vunpack.c.l.b16 %v465
    %v600 = vunpack.c.l.b16 %v466
    %v601 = vunpack.c.l.b16 %v467
    %v602 = vunpack.c.l.b16 %v468
    %v603 = vunpack.c.l.b16 %v469
    %v604 = vunpack.c.l.b16 %v470
    %v605 = vunpack.c.l.b16 %v471
    %v606 = vunpack.c.l.b16 %v472
    %v607 = vunpack.c.l.b16 %v473
    %v608 = vunpack.c.l.b16 %v474
    %v609 = vunpack.c.l.b16 %v475
    %v610 = vunpack.c.l.b16 %v476
    %v611 = vunpack.c.l.b16 %v477
    %v612 = vunpack.c.l.b16 %v478
    %v613 = vunpack.c.l.b16 %v479
    %v614 = vunpack.c.l.b16 %v480
    %v615 = vpack.c.b16 %v552, %v551
    %v616 = vpack.c.b16 %v554, %v553
    %v617 = vpack.c.b16 %v556, %v555
    %v618 = vpack.c.b16 %v558, %v557
    %v619 = vpack.c.b16 %v560, %v559
    %v620 = vpack.c.b16 %v562, %v561
    %v621 = vpack.c.b16 %v564, %v563
    %v622 = vpack.c.b16 %v566, %v565
    %v623 = vpack.c.b16 %v568, %v567
    %v624 = vpack.c.b16 %v570, %v569
    %v625 = vpack.c.b16 %v572, %v571
    %v626 = vpack.c.b16 %v574, %v573
    %v627 = vpack.c.b16 %v576, %v575
    %v628 = vpack.c.b16 %v578, %v577
    %v629 = vpack.c.b16 %v580, %v579
    %v630 = vpack.c.b16 %v582, %v581
    %v631 = vpack.c.b16 %v584, %v583
    %v632 = vpack.c.b16 %v586, %v585
    %v633 = vpack.c.b16 %v588, %v587
    %v634 = vpack.c.b16 %v590, %v589
    %v635 = vpack.c.b16 %v592, %v591
    %v636 = vpack.c.b16 %v594, %v593
    %v637 = vpack.c.b16 %v596, %v595
    %v638 = vpack.c.b16 %v598, %v597
    %v639 = vpack.c.b16 %v600, %v599
    %v640 = vpack.c.b16 %v602, %v601
    %v641 = vpack.c.b16 %v604, %v603
    %v642 = vpack.c.b16 %v606, %v605
    %v643 = vpack.c.b16 %v608, %v607
    %v644 = vpack.c.b16 %v610, %v609
    %v645 = vpack.c.b16 %v612, %v611
    %v646 = vpack.c.b16 %v614, %v613
    %679 = vmatprep.subr.bf16.mxu0 0
    %680 = vmatpush1.bf16.msra.mxu0 %v615
    %681 = vmatprep.subr.bf16.mxu0 0
    %682 = vmatpush1.bf16.msra.mxu0 %v616
    %683 = vmatprep.subr.bf16.mxu0 0
    %684 = vmatpush1.bf16.msra.mxu0 %v617
    %685 = vmatprep.subr.bf16.mxu0 0
    %686 = vmatpush1.bf16.msra.mxu0 %v618
    %687 = vmatprep.subr.bf16.mxu0 0
    %688 = vmatpush1.bf16.msra.mxu0 %v619
    %689 = vmatprep.subr.bf16.mxu0 0
    %690 = vmatpush1.bf16.msra.mxu0 %v620
    %691 = vmatprep.subr.bf16.mxu0 0
    %692 = vmatpush1.bf16.msra.mxu0 %v621
    %693 = vmatprep.subr.bf16.mxu0 0
    %694 = vmatpush1.bf16.msra.mxu0 %v622
    %695 = vmatprep.subr.bf16.mxu0 0
    %696 = vmatpush1.bf16.msra.mxu0 %v623
    %697 = vmatprep.subr.bf16.mxu0 0
    %698 = vmatpush1.bf16.msra.mxu0 %v624
    %699 = vmatprep.subr.bf16.mxu0 0
    %700 = vmatpush1.bf16.msra.mxu0 %v625
    %701 = vmatprep.subr.bf16.mxu0 0
    %702 = vmatpush1.bf16.msra.mxu0 %v626
    %703 = vmatprep.subr.bf16.mxu0 0
    %704 = vmatpush1.bf16.msra.mxu0 %v627
    %705 = vmatprep.subr.bf16.mxu0 0
    %706 = vmatpush1.bf16.msra.mxu0 %v628
    %707 = vmatprep.subr.bf16.mxu0 0
    %708 = vmatpush1.bf16.msra.mxu0 %v629
    %709 = vmatprep.subr.bf16.mxu0 0
    %710 = vmatpush1.bf16.msra.mxu0 %v630
    %711 = vmatprep.mubr.bf16.mxu0 %v484
    %712 = vmatmul.mubr.bf16.gmra.mrb[0].mxu0 %v483
    %v713 = vpop.f32.mrb[0].mxu0
    %v714 = vadd.f32 0.0, %v713
    %v715 = vpop.f32.mrb[0].mxu0
    %v716 = vpop.f32.mrb[0].mxu0
    %v717 = vadd.f32 0.0, %v716
    %v718 = vpop.f32.mrb[0].mxu0
    %719 = vdwg.mxu0
    %720 = vmatprep.subr.bf16.mxu0 0
    %721 = vmatpush1.bf16.msra.mxu0 %v631
    %722 = vmatprep.subr.bf16.mxu0 0
    %723 = vmatpush1.bf16.msra.mxu0 %v632
    %724 = vmatprep.subr.bf16.mxu0 0
    %725 = vmatpush1.bf16.msra.mxu0 %v633
    %726 = vmatprep.subr.bf16.mxu0 0
    %727 = vmatpush1.bf16.msra.mxu0 %v634
    %728 = vmatprep.subr.bf16.mxu0 0
    %729 = vmatpush1.bf16.msra.mxu0 %v635
    %730 = vmatprep.subr.bf16.mxu0 0
    %731 = vmatpush1.bf16.msra.mxu0 %v636
    %732 = vmatprep.subr.bf16.mxu0 0
    %733 = vmatpush1.bf16.msra.mxu0 %v637
    %734 = vmatprep.subr.bf16.mxu0 0
    %735 = vmatpush1.bf16.msra.mxu0 %v638
    %736 = vmatprep.subr.bf16.mxu0 0
    %737 = vmatpush1.bf16.msra.mxu0 %v639
    %738 = vmatprep.subr.bf16.mxu0 0
    %739 = vmatpush1.bf16.msra.mxu0 %v640
    %740 = vmatprep.subr.bf16.mxu0 0
    %741 = vmatpush1.bf16.msra.mxu0 %v641
    %742 = vmatprep.subr.bf16.mxu0 0
    %743 = vmatpush1.bf16.msra.mxu0 %v642
    %744 = vmatprep.subr.bf16.mxu0 0
    %745 = vmatpush1.bf16.msra.mxu0 %v643
    %746 = vmatprep.subr.bf16.mxu0 0
    %747 = vmatpush1.bf16.msra.mxu0 %v644
    %748 = vmatprep.subr.bf16.mxu0 0
    %749 = vmatpush1.bf16.msra.mxu0 %v645
    %750 = vmatprep.subr.bf16.mxu0 0
    %751 = vmatpush1.bf16.msra.mxu0 %v646
    %752 = vmatprep.mubr.bf16.mxu0 %v486
    %753 = vmatmul.mubr.bf16.gmra.mrb[0].mxu0 %v485
    %v754 = vpop.f32.mrb[0].mxu0
    %v755 = vadd.f32 %v714, %v754
    %v756 = vpop.f32.mrb[0].mxu0
    %v757 = vpop.f32.mrb[0].mxu0
    %v758 = vadd.f32 %v717, %v757
    %v759 = vpop.f32.mrb[0].mxu0
    %760 = vdwg.mxu0
    %v761 = vadd.f32 %v481, %v755
    %v762 = vadd.f32 %v482, %v758
    %763 = vst [vmem:[#allocation2] sm:$0xff] %v761
    %764 = vst [vmem:[#allocation2 + $0x8] sm:$0xff] %v762
    // Predicated region
    $region38: #{tpu_custom_call.1} parent=1 // pred_check
      %p765 = pneg %p63
    $region39: #{tpu_custom_call.1} parent=1 // pred_check_branch
      %767 = sbr.rel (%p765) target = $region41
    $region40: #{tpu_custom_call.1} parent=1 // pred_region
      %v768 = vld [vmem:[#allocation2] sm:$0xff]
      %v769 = vld [vmem:[#allocation2 + $0x8] sm:$0xff]
      %v770 = vld [vmem:[%s4] sm:$0x1]
      %v772 = vlaneseq
      %v773 = vshrl.u32 %v772, 7
      %v774 = vsub.s32 0, %v773
      %v775 = vrot.slane %v770, %v774
      %v777 = vadd.f32 %v768, %v775
      %v778 = vadd.f32 %v769, %v775
      %779 = vst [vmem:[#allocation9] sm:$0xff] %v777
      %780 = vst [vmem:[#allocation9 + $0x8] sm:$0xff] %v778
    $region41: #{tpu_custom_call.1} parent=1 // pred_fallthru
      _
    // Predicated region
    $region42: #{tpu_custom_call.1} parent=1 // pred_check
      _
    $region43: #{tpu_custom_call.1} parent=1 // pred_check_branch
      %782 = sbr.rel (0) target = $region45
    $region44: #{tpu_custom_call.1} parent=1 // pred_region
      %s784 = ssub.s32 256, 256
      %785 = vsyncadd [#allocation5], %s784
      %s786 = sshll.u32 [#allocation9], 4
      %s787 = int_to_ptr.vmem [resolvable:$true] %s786
      %792 = dma.vmem_to_hbm [thread:$0]  %s787, 256, %s5, [#allocation5], 128, 128, 8
    $region45: #{tpu_custom_call.1} parent=1 // pred_fallthru
      _
    // Predicated region
    $region46: #{tpu_custom_call.1} parent=1 // pred_check
      _
    $region47: #{tpu_custom_call.1} parent=1 // pred_check_branch
      %794 = sbr.rel (0) target = $region49
    $region48: #{tpu_custom_call.1} parent=1 // pred_region
      %795 = dma.done [#allocation5], 256
    $region49: #{tpu_custom_call.1} parent=1 // pred_fallthru
      _
    %796 = vsyncpa [#allocation4], 1
    %797 = vsyncpa [#allocation7], 1
    %798 = vsyncpa [#allocation5], 1

</llo_original>
